<compile_context>
chip_gen: v5e
topology: v5e:2x2
jax: 0.10.0
libtpu: 0.0.40
codegen_flags: <defaults>
</compile_context>

<pallas_src>
import math

import jax
import jax.numpy as jnp
from jax.experimental import pallas as pl
from jax.experimental.pallas import tpu as pltpu

# Default shift offsets of the PyTorch module: (dy, dx) per channel group.
SHIFT_OFFSETS = [(1, 0), (-1, 0), (0, 1), (0, -1),
                 (1, 1), (-1, -1), (1, -1), (-1, 1)]
BN_EPS = 1e-5
_INV_SQRT2 = 1.0 / math.sqrt(2.0)


def _shifted_group(xg, dy, dx, h, w):
    """Circular roll by (dy, dx) of a (cpg, H*W) row-major-flattened spatial block.

    A flat lane roll by s1 = dy*W + dx equals the 2-D circular roll everywhere
    except the |dx| columns that wrap across a row boundary; those columns are
    taken from a second flat roll offset by -/+ one full row (s1 -/+ W).
    All rolls are static-shift XLU lane rotations (cheap, off the VPU slot).
    """
    hw = h * w
    s1 = (dy * w + dx) % hw
    r1 = pltpu.roll(xg, s1, axis=1) if s1 != 0 else xg
    if dx == 0:
        return r1
    s2 = (s1 - w) % hw if dx > 0 else (s1 + w) % hw
    r2 = pltpu.roll(xg, s2, axis=1) if s2 != 0 else xg
    col = jax.lax.broadcasted_iota(jnp.int32, xg.shape, 1) % w
    wrapped = (col < dx) if dx > 0 else (col >= w + dx)
    return jnp.where(wrapped, r2, r1)


def _make_kernel(shift_offsets, cpg, h, w):
    """Fused grouped-shift + 1x1 conv (BN/bias folded) + exact-erf GELU."""

    def kernel(x_ref, w_ref, b_ref, o_ref):
        # x_ref: (1, C, H*W)  w_ref: (Cout, Cin)  b_ref: (Cout, 1)  o_ref: (1, C, H*W)
        x = x_ref[0]                                         # (C, H*W)
        parts = []
        for g, (dy, dx) in enumerate(shift_offsets):         # static unroll (8 groups)
            xg = x[g * cpg:(g + 1) * cpg, :]                 # (cpg, H*W)
            parts.append(_shifted_group(xg, dy, dx, h, w))
        xs = jnp.concatenate(parts, axis=0)                  # (C, H*W), shifted

        # 1x1 conv with BatchNorm + bias pre-folded into w/b:  y = W' @ xs + b'
        y = jnp.dot(w_ref[...], xs, preferred_element_type=jnp.float32)
        y = y + b_ref[...]                                   # (C,1) broadcast over lanes
        # Exact erf-GELU (matches nn.GELU() default).  tanh-approx would move the
        # transcendental to the EUP but trades accuracy; kept exact for parity.
        y = 0.5 * y * (1.0 + jax.lax.erf(y * _INV_SQRT2))
        o_ref[0] = y.astype(o_ref.dtype)

    return kernel


def grouped_shift_conv2d(x, w_pw, b_pw, bn_gamma, bn_beta, bn_mean, bn_var,
                         shift_offsets=SHIFT_OFFSETS, stream_dtype=None,
                         out_dtype=None):
    """Forward pass of GroupedShiftConv2d (use_1x1_after_shift=True).

    x:      (B, C, H, W) NCHW
    w_pw:   (C, C, 1, 1) nn.Conv2d(C, C, 1).weight
    b_pw:   (C,)         conv bias
    bn_*:   (C,)         BatchNorm affine + running stats (eval mode)
    stream_dtype: optional dtype for the activation/weight HBM streams
                  (e.g. jnp.bfloat16 to halve bandwidth); accumulation is f32.
    returns (B, C, H, W) in out_dtype (default: x.dtype)
    """
    B, C, H, W = x.shape
    G = len(shift_offsets)
    assert C % G == 0, f"in_channels={C} must be divisible by groups={G}"
    for dy, dx in shift_offsets:
        assert abs(dx) < W, "dx shift must be smaller than the image width"
    cpg = C // G
    HW = H * W

    stream_dtype = jnp.dtype(stream_dtype) if stream_dtype is not None else x.dtype
    out_dtype = jnp.dtype(out_dtype) if out_dtype is not None else x.dtype

    # --- Fold BatchNorm (eval, running stats) + conv bias into weight/bias ---
    # TODO(synk): training-mode SyncBN (cross-replica batch statistics) is not
    # reproduced; eval-mode running statistics are folded in instead.
    scale = bn_gamma * jax.lax.rsqrt(bn_var + BN_EPS)                       # (C,)
    w_fold = (w_pw.reshape(C, C).astype(jnp.float32)
              * scale[:, None]).astype(stream_dtype)                        # (Cout, Cin)
    b_fold = ((b_pw - bn_mean) * scale + bn_beta).astype(jnp.float32).reshape(C, 1)

    # Free view: NCHW -> (B, C, H*W).  Channels on sublanes, pixels on lanes.
    x_flat = x.reshape(B, C, HW).astype(stream_dtype)

    # VMEM budget from the block math (double-buffered in/out + weight + temps),
    # clamped so it also fits v7x's 64 MiB physical VMEM.
    it_s = jnp.dtype(stream_dtype).itemsize
    it_o = jnp.dtype(out_dtype).itemsize
    vmem_need = (2 * C * HW * (it_s + it_o)          # double-buffered in + out blocks
                 + 2 * (C * C * it_s + C * 128 * 4)  # weight + lane-padded bias
                 + 8 * C * HW * 4                    # roll/select/matmul f32 temporaries
                 + (2 << 20))
    vmem_limit = int(min(max(vmem_need, 16 << 20), 64 << 20))
    # TODO(synk): for very large C*H*W per image (exceeding VMEM) add spatial
    # tiling with halo handling; whole-image blocks are used here.

    out = pl.pallas_call(
        _make_kernel(tuple(shift_offsets), cpg, H, W),
        out_shape=jax.ShapeDtypeStruct((B, C, HW), out_dtype),
        grid_spec=pltpu.PrefetchScalarGridSpec(
            num_scalar_prefetch=0,
            grid=(B,),
            in_specs=[
                pl.BlockSpec((1, C, HW), lambda b: (b, 0, 0)),   # activations (NCHW view)
                pl.BlockSpec((C, C), lambda b: (0, 0)),          # folded 1x1 weight
                pl.BlockSpec((C, 1), lambda b: (0, 0)),          # folded bias
            ],
            out_specs=pl.BlockSpec((1, C, HW), lambda b: (b, 0, 0)),
        ),
        compiler_params=pltpu.CompilerParams(
            dimension_semantics=("parallel",),
            vmem_limit_bytes=vmem_limit,
        ),
    )(x_flat, w_fold, b_fold)

    return out.reshape(B, C, H, W)


def _reference(x, w_pw, b_pw, bn_gamma, bn_beta, bn_mean, bn_var):
    """Pure-JAX reference matching the PyTorch forward (eval-mode BN)."""
    B, C, H, W = x.shape
    cpg = C // len(SHIFT_OFFSETS)
    parts = []
    for g, (dy, dx) in enumerate(SHIFT_OFFSETS):
        parts.append(jnp.roll(x[:, g * cpg:(g + 1) * cpg], (dy, dx), axis=(2, 3)))
    xs = jnp.concatenate(parts, axis=1)
    y = jnp.einsum('oc,bchw->bohw', w_pw.reshape(C, C), xs)
    y = y + b_pw[None, :, None, None]
    y = ((y - bn_mean[None, :, None, None])
         * (bn_gamma[None, :, None, None]
            / jnp.sqrt(bn_var[None, :, None, None] + BN_EPS))
         + bn_beta[None, :, None, None])
    return 0.5 * y * (1.0 + jax.lax.erf(y * _INV_SQRT2))


if __name__ == "__main__":
    # in_channels must be divisible by 8 groups -> use C=16.
    B, C, H, W = 2, 16, 16, 16

    key = jax.random.PRNGKey(0)
    ks = jax.random.split(key, 7)
    x = jax.random.normal(ks[0], (B, C, H, W), jnp.float32)
    # nn.Conv2d(C, C, kernel_size=1): weight (C, C, 1, 1), bias (C,)
    w_pw = jax.random.normal(ks[1], (C, C, 1, 1), jnp.float32) / math.sqrt(C)
    b_pw = 0.1 * jax.random.normal(ks[2], (C,), jnp.float32)
    # BatchNorm params / running stats (deterministic synthetic values)
    bn_gamma = 1.0 + 0.1 * jax.random.normal(ks[3], (C,), jnp.float32)
    bn_beta = 0.1 * jax.random.normal(ks[4], (C,), jnp.float32)
    bn_mean = 0.1 * jax.random.normal(ks[5], (C,), jnp.float32)
    bn_var = jnp.abs(jax.random.normal(ks[6], (C,), jnp.float32)) + 0.5

    ref = _reference(x, w_pw, b_pw, bn_gamma, bn_beta, bn_mean, bn_var)

    # f32 path (strict check vs the f32 reference).
    out = grouped_shift_conv2d(x, w_pw, b_pw, bn_gamma, bn_beta, bn_mean, bn_var)
    out = jax.block_until_ready(out)
    assert out.shape == (B, C, H, W) and out.dtype == jnp.float32
    err = float(jnp.max(jnp.abs(out - ref)))
    assert jnp.allclose(out, ref, rtol=2e-3, atol=2e-3), f"f32 max abs err={err}"

    # bf16-streaming path (halves HBM traffic; f32 accumulation/epilogue).
    # Tolerance is loose only because inputs/weights are rounded to bf16.
    out_bf16 = grouped_shift_conv2d(x, w_pw, b_pw, bn_gamma, bn_beta, bn_mean,
                                    bn_var, stream_dtype=jnp.bfloat16)
    out_bf16 = jax.block_until_ready(out_bf16)
    err_bf16 = float(jnp.max(jnp.abs(out_bf16 - ref)))
    assert jnp.allclose(out_bf16, ref, rtol=5e-2, atol=1e-1), \
        f"bf16 max abs err={err_bf16}"

    print("KERNEL_OK")
</pallas_src>

<mosaic_0001>
module attributes {stable_mosaic.version = 11 : i64} {
  func.func @kernel(%arg0: i32, %arg1: memref<1x16x256xf32, #tpu.memory_space<vmem>>, %arg2: memref<16x16xf32, #tpu.memory_space<vmem>>, %arg3: memref<16x1xf32, #tpu.memory_space<vmem>>, %arg4: memref<1x16x256xf32, #tpu.memory_space<vmem>>) attributes {dimension_semantics = [#tpu.dimension_semantics<parallel>], iteration_bounds = array<i64: 2>, scalar_prefetch = 0 : i64, scratch_operands = 0 : i64, tpu.core_type = #tpu.core_type<tc>, window_params = [{transform_indices = @transform_0, window_bounds = array<i64: 1, 16, 256>}, {pipeline_mode = #tpu.pipeline_mode<synchronous>, transform_indices = @transform_1, window_bounds = array<i64: 16, 16>}, {pipeline_mode = #tpu.pipeline_mode<synchronous>, transform_indices = @transform_2, window_bounds = array<i64: 16, 1>}, {transform_indices = @transform_3, window_bounds = array<i64: 1, 16, 256>}]} {
    %c0 = arith.constant 0 : index
    %c0_0 = arith.constant 0 : index
    %c0_1 = arith.constant 0 : index
    %0 = vector.load %arg1[%c0, %c0_0, %c0_1] : memref<1x16x256xf32, #tpu.memory_space<vmem>>, vector<1x16x256xf32>
    %1 = vector.shape_cast %0 : vector<1x16x256xf32> to vector<16x256xf32>
    %2 = vector.extract_strided_slice %1 {offsets = [0, 0], sizes = [2, 256], strides = [1, 1]} : vector<16x256xf32> to vector<2x256xf32>
    %c16_i32 = arith.constant 16 : i32
    %3 = tpu.dynamic_rotate %2 by %c16_i32 dim 1 : vector<2x256xf32>, i32 -> vector<2x256xf32>
    %4 = vector.extract_strided_slice %1 {offsets = [2, 0], sizes = [2, 256], strides = [1, 1]} : vector<16x256xf32> to vector<2x256xf32>
    %c240_i32 = arith.constant 240 : i32
    %5 = tpu.dynamic_rotate %4 by %c240_i32 dim 1 : vector<2x256xf32>, i32 -> vector<2x256xf32>
    %6 = vector.extract_strided_slice %1 {offsets = [4, 0], sizes = [2, 256], strides = [1, 1]} : vector<16x256xf32> to vector<2x256xf32>
    %c1_i32 = arith.constant 1 : i32
    %7 = tpu.dynamic_rotate %6 by %c1_i32 dim 1 : vector<2x256xf32>, i32 -> vector<2x256xf32>
    %c241_i32 = arith.constant 241 : i32
    %8 = tpu.dynamic_rotate %6 by %c241_i32 dim 1 : vector<2x256xf32>, i32 -> vector<2x256xf32>
    %9 = tpu.iota {dimensions = array<i32: 1>} : vector<2x256xi32>
    %c16_i32_2 = arith.constant 16 : i32
    %c0_i32 = arith.constant 0 : i32
    %10 = arith.cmpi eq, %c16_i32_2, %c0_i32 : i32
    %c1_i32_3 = arith.constant 1 : i32
    %11 = arith.select %10, %c1_i32_3, %c16_i32_2 : i32
    %12 = vector.broadcast %11 : i32 to vector<2x256xi32>
    %13 = arith.remsi %9, %12 : vector<2x256xi32>
    %c0_i32_4 = arith.constant 0 : i32
    %14 = vector.broadcast %c0_i32_4 : i32 to vector<2x256xi32>
    %15 = arith.cmpi ne, %13, %14 : vector<2x256xi32>
    %c0_i32_5 = arith.constant 0 : i32
    %16 = vector.broadcast %c0_i32_5 : i32 to vector<2x256xi32>
    %17 = arith.cmpi slt, %13, %16 : vector<2x256xi32>
    %c0_i32_6 = arith.constant 0 : i32
    %18 = arith.cmpi slt, %11, %c0_i32_6 : i32
    %19 = vector.broadcast %18 : i1 to vector<2x256xi1>
    %20 = vector.broadcast %19 : vector<2x256xi1> to vector<2x256xi1>
    %21 = arith.xori %17, %20 : vector<2x256xi1>
    %22 = arith.andi %21, %15 : vector<2x256xi1>
    %23 = vector.broadcast %11 : i32 to vector<2x256xi32>
    %24 = arith.addi %13, %23 : vector<2x256xi32>
    %25 = arith.select %22, %24, %13 : vector<2x256xi1>, vector<2x256xi32>
    %c1_i32_7 = arith.constant 1 : i32
    %26 = vector.broadcast %c1_i32_7 : i32 to vector<2x256xi32>
    %27 = arith.cmpi slt, %25, %26 : vector<2x256xi32>
    %28 = arith.select %27, %8, %7 : vector<2x256xi1>, vector<2x256xf32>
    %29 = vector.extract_strided_slice %1 {offsets = [6, 0], sizes = [2, 256], strides = [1, 1]} : vector<16x256xf32> to vector<2x256xf32>
    %c255_i32 = arith.constant 255 : i32
    %30 = tpu.dynamic_rotate %29 by %c255_i32 dim 1 : vector<2x256xf32>, i32 -> vector<2x256xf32>
    %c15_i32 = arith.constant 15 : i32
    %31 = tpu.dynamic_rotate %29 by %c15_i32 dim 1 : vector<2x256xf32>, i32 -> vector<2x256xf32>
    %32 = tpu.iota {dimensions = array<i32: 1>} : vector<2x256xi32>
    %c16_i32_8 = arith.constant 16 : i32
    %c0_i32_9 = arith.constant 0 : i32
    %33 = arith.cmpi eq, %c16_i32_8, %c0_i32_9 : i32
    %c1_i32_10 = arith.constant 1 : i32
    %34 = arith.select %33, %c1_i32_10, %c16_i32_8 : i32
    %35 = vector.broadcast %34 : i32 to vector<2x256xi32>
    %36 = arith.remsi %32, %35 : vector<2x256xi32>
    %c0_i32_11 = arith.constant 0 : i32
    %37 = vector.broadcast %c0_i32_11 : i32 to vector<2x256xi32>
    %38 = arith.cmpi ne, %36, %37 : vector<2x256xi32>
    %c0_i32_12 = arith.constant 0 : i32
    %39 = vector.broadcast %c0_i32_12 : i32 to vector<2x256xi32>
    %40 = arith.cmpi slt, %36, %39 : vector<2x256xi32>
    %c0_i32_13 = arith.constant 0 : i32
    %41 = arith.cmpi slt, %34, %c0_i32_13 : i32
    %42 = vector.broadcast %41 : i1 to vector<2x256xi1>
    %43 = vector.broadcast %42 : vector<2x256xi1> to vector<2x256xi1>
    %44 = arith.xori %40, %43 : vector<2x256xi1>
    %45 = arith.andi %44, %38 : vector<2x256xi1>
    %46 = vector.broadcast %34 : i32 to vector<2x256xi32>
    %47 = arith.addi %36, %46 : vector<2x256xi32>
    %48 = arith.select %45, %47, %36 : vector<2x256xi1>, vector<2x256xi32>
    %c15_i32_14 = arith.constant 15 : i32
    %49 = vector.broadcast %c15_i32_14 : i32 to vector<2x256xi32>
    %50 = arith.cmpi sge, %48, %49 : vector<2x256xi32>
    %51 = arith.select %50, %31, %30 : vector<2x256xi1>, vector<2x256xf32>
    %52 = vector.extract_strided_slice %1 {offsets = [8, 0], sizes = [2, 256], strides = [1, 1]} : vector<16x256xf32> to vector<2x256xf32>
    %c17_i32 = arith.constant 17 : i32
    %53 = tpu.dynamic_rotate %52 by %c17_i32 dim 1 : vector<2x256xf32>, i32 -> vector<2x256xf32>
    %c1_i32_15 = arith.constant 1 : i32
    %54 = tpu.dynamic_rotate %52 by %c1_i32_15 dim 1 : vector<2x256xf32>, i32 -> vector<2x256xf32>
    %55 = tpu.iota {dimensions = array<i32: 1>} : vector<2x256xi32>
    %c16_i32_16 = arith.constant 16 : i32
    %c0_i32_17 = arith.constant 0 : i32
    %56 = arith.cmpi eq, %c16_i32_16, %c0_i32_17 : i32
    %c1_i32_18 = arith.constant 1 : i32
    %57 = arith.select %56, %c1_i32_18, %c16_i32_16 : i32
    %58 = vector.broadcast %57 : i32 to vector<2x256xi32>
    %59 = arith.remsi %55, %58 : vector<2x256xi32>
    %c0_i32_19 = arith.constant 0 : i32
    %60 = vector.broadcast %c0_i32_19 : i32 to vector<2x256xi32>
    %61 = arith.cmpi ne, %59, %60 : vector<2x256xi32>
    %c0_i32_20 = arith.constant 0 : i32
    %62 = vector.broadcast %c0_i32_20 : i32 to vector<2x256xi32>
    %63 = arith.cmpi slt, %59, %62 : vector<2x256xi32>
    %c0_i32_21 = arith.constant 0 : i32
    %64 = arith.cmpi slt, %57, %c0_i32_21 : i32
    %65 = vector.broadcast %64 : i1 to vector<2x256xi1>
    %66 = vector.broadcast %65 : vector<2x256xi1> to vector<2x256xi1>
    %67 = arith.xori %63, %66 : vector<2x256xi1>
    %68 = arith.andi %67, %61 : vector<2x256xi1>
    %69 = vector.broadcast %57 : i32 to vector<2x256xi32>
    %70 = arith.addi %59, %69 : vector<2x256xi32>
    %71 = arith.select %68, %70, %59 : vector<2x256xi1>, vector<2x256xi32>
    %c1_i32_22 = arith.constant 1 : i32
    %72 = vector.broadcast %c1_i32_22 : i32 to vector<2x256xi32>
    %73 = arith.cmpi slt, %71, %72 : vector<2x256xi32>
    %74 = arith.select %73, %54, %53 : vector<2x256xi1>, vector<2x256xf32>
    %75 = vector.extract_strided_slice %1 {offsets = [10, 0], sizes = [2, 256], strides = [1, 1]} : vector<16x256xf32> to vector<2x256xf32>
    %c239_i32 = arith.constant 239 : i32
    %76 = tpu.dynamic_rotate %75 by %c239_i32 dim 1 : vector<2x256xf32>, i32 -> vector<2x256xf32>
    %c255_i32_23 = arith.constant 255 : i32
    %77 = tpu.dynamic_rotate %75 by %c255_i32_23 dim 1 : vector<2x256xf32>, i32 -> vector<2x256xf32>
    %78 = tpu.iota {dimensions = array<i32: 1>} : vector<2x256xi32>
    %c16_i32_24 = arith.constant 16 : i32
    %c0_i32_25 = arith.constant 0 : i32
    %79 = arith.cmpi eq, %c16_i32_24, %c0_i32_25 : i32
    %c1_i32_26 = arith.constant 1 : i32
    %80 = arith.select %79, %c1_i32_26, %c16_i32_24 : i32
    %81 = vector.broadcast %80 : i32 to vector<2x256xi32>
    %82 = arith.remsi %78, %81 : vector<2x256xi32>
    %c0_i32_27 = arith.constant 0 : i32
    %83 = vector.broadcast %c0_i32_27 : i32 to vector<2x256xi32>
    %84 = arith.cmpi ne, %82, %83 : vector<2x256xi32>
    %c0_i32_28 = arith.constant 0 : i32
    %85 = vector.broadcast %c0_i32_28 : i32 to vector<2x256xi32>
    %86 = arith.cmpi slt, %82, %85 : vector<2x256xi32>
    %c0_i32_29 = arith.constant 0 : i32
    %87 = arith.cmpi slt, %80, %c0_i32_29 : i32
    %88 = vector.broadcast %87 : i1 to vector<2x256xi1>
    %89 = vector.broadcast %88 : vector<2x256xi1> to vector<2x256xi1>
    %90 = arith.xori %86, %89 : vector<2x256xi1>
    %91 = arith.andi %90, %84 : vector<2x256xi1>
    %92 = vector.broadcast %80 : i32 to vector<2x256xi32>
    %93 = arith.addi %82, %92 : vector<2x256xi32>
    %94 = arith.select %91, %93, %82 : vector<2x256xi1>, vector<2x256xi32>
    %c15_i32_30 = arith.constant 15 : i32
    %95 = vector.broadcast %c15_i32_30 : i32 to vector<2x256xi32>
    %96 = arith.cmpi sge, %94, %95 : vector<2x256xi32>
    %97 = arith.select %96, %77, %76 : vector<2x256xi1>, vector<2x256xf32>
    %98 = vector.extract_strided_slice %1 {offsets = [12, 0], sizes = [2, 256], strides = [1, 1]} : vector<16x256xf32> to vector<2x256xf32>
    %c15_i32_31 = arith.constant 15 : i32
    %99 = tpu.dynamic_rotate %98 by %c15_i32_31 dim 1 : vector<2x256xf32>, i32 -> vector<2x256xf32>
    %c31_i32 = arith.constant 31 : i32
    %100 = tpu.dynamic_rotate %98 by %c31_i32 dim 1 : vector<2x256xf32>, i32 -> vector<2x256xf32>
    %101 = tpu.iota {dimensions = array<i32: 1>} : vector<2x256xi32>
    %c16_i32_32 = arith.constant 16 : i32
    %c0_i32_33 = arith.constant 0 : i32
    %102 = arith.cmpi eq, %c16_i32_32, %c0_i32_33 : i32
    %c1_i32_34 = arith.constant 1 : i32
    %103 = arith.select %102, %c1_i32_34, %c16_i32_32 : i32
    %104 = vector.broadcast %103 : i32 to vector<2x256xi32>
    %105 = arith.remsi %101, %104 : vector<2x256xi32>
    %c0_i32_35 = arith.constant 0 : i32
    %106 = vector.broadcast %c0_i32_35 : i32 to vector<2x256xi32>
    %107 = arith.cmpi ne, %105, %106 : vector<2x256xi32>
    %c0_i32_36 = arith.constant 0 : i32
    %108 = vector.broadcast %c0_i32_36 : i32 to vector<2x256xi32>
    %109 = arith.cmpi slt, %105, %108 : vector<2x256xi32>
    %c0_i32_37 = arith.constant 0 : i32
    %110 = arith.cmpi slt, %103, %c0_i32_37 : i32
    %111 = vector.broadcast %110 : i1 to vector<2x256xi1>
    %112 = vector.broadcast %111 : vector<2x256xi1> to vector<2x256xi1>
    %113 = arith.xori %109, %112 : vector<2x256xi1>
    %114 = arith.andi %113, %107 : vector<2x256xi1>
    %115 = vector.broadcast %103 : i32 to vector<2x256xi32>
    %116 = arith.addi %105, %115 : vector<2x256xi32>
    %117 = arith.select %114, %116, %105 : vector<2x256xi1>, vector<2x256xi32>
    %c15_i32_38 = arith.constant 15 : i32
    %118 = vector.broadcast %c15_i32_38 : i32 to vector<2x256xi32>
    %119 = arith.cmpi sge, %117, %118 : vector<2x256xi32>
    %120 = arith.select %119, %100, %99 : vector<2x256xi1>, vector<2x256xf32>
    %121 = vector.extract_strided_slice %1 {offsets = [14, 0], sizes = [2, 256], strides = [1, 1]} : vector<16x256xf32> to vector<2x256xf32>
    %c241_i32_39 = arith.constant 241 : i32
    %122 = tpu.dynamic_rotate %121 by %c241_i32_39 dim 1 : vector<2x256xf32>, i32 -> vector<2x256xf32>
    %c225_i32 = arith.constant 225 : i32
    %123 = tpu.dynamic_rotate %121 by %c225_i32 dim 1 : vector<2x256xf32>, i32 -> vector<2x256xf32>
    %124 = tpu.iota {dimensions = array<i32: 1>} : vector<2x256xi32>
    %c16_i32_40 = arith.constant 16 : i32
    %c0_i32_41 = arith.constant 0 : i32
    %125 = arith.cmpi eq, %c16_i32_40, %c0_i32_41 : i32
    %c1_i32_42 = arith.constant 1 : i32
    %126 = arith.select %125, %c1_i32_42, %c16_i32_40 : i32
    %127 = vector.broadcast %126 : i32 to vector<2x256xi32>
    %128 = arith.remsi %124, %127 : vector<2x256xi32>
    %c0_i32_43 = arith.constant 0 : i32
    %129 = vector.broadcast %c0_i32_43 : i32 to vector<2x256xi32>
    %130 = arith.cmpi ne, %128, %129 : vector<2x256xi32>
    %c0_i32_44 = arith.constant 0 : i32
    %131 = vector.broadcast %c0_i32_44 : i32 to vector<2x256xi32>
    %132 = arith.cmpi slt, %128, %131 : vector<2x256xi32>
    %c0_i32_45 = arith.constant 0 : i32
    %133 = arith.cmpi slt, %126, %c0_i32_45 : i32
    %134 = vector.broadcast %133 : i1 to vector<2x256xi1>
    %135 = vector.broadcast %134 : vector<2x256xi1> to vector<2x256xi1>
    %136 = arith.xori %132, %135 : vector<2x256xi1>
    %137 = arith.andi %136, %130 : vector<2x256xi1>
    %138 = vector.broadcast %126 : i32 to vector<2x256xi32>
    %139 = arith.addi %128, %138 : vector<2x256xi32>
    %140 = arith.select %137, %139, %128 : vector<2x256xi1>, vector<2x256xi32>
    %c1_i32_46 = arith.constant 1 : i32
    %141 = vector.broadcast %c1_i32_46 : i32 to vector<2x256xi32>
    %142 = arith.cmpi slt, %140, %141 : vector<2x256xi32>
    %143 = arith.select %142, %123, %122 : vector<2x256xi1>, vector<2x256xf32>
    %144 = tpu.concatenate %3, %5, %28, %51, %74, %97, %120, %143 in 0 : vector<2x256xf32>, vector<2x256xf32>, vector<2x256xf32>, vector<2x256xf32>, vector<2x256xf32>, vector<2x256xf32>, vector<2x256xf32>, vector<2x256xf32> -> vector<16x256xf32>
    %c0_47 = arith.constant 0 : index
    %c0_48 = arith.constant 0 : index
    %145 = vector.load %arg2[%c0_47, %c0_48] : memref<16x16xf32, #tpu.memory_space<vmem>>, vector<16x16xf32>
    %cst = arith.constant dense<0.000000e+00> : vector<16x256xf32>
    %146 = tpu.matmul %145, %144, %cst {dimension_numbers = #tpu.dot_dimension_numbers<[1], [0], [0], [1], [0, 0, 1, 1], [], []>} : vector<16x16xf32>, vector<16x256xf32>, vector<16x256xf32> -> vector<16x256xf32>
    %c0_49 = arith.constant 0 : index
    %c0_50 = arith.constant 0 : index
    %147 = vector.load %arg3[%c0_49, %c0_50] : memref<16x1xf32, #tpu.memory_space<vmem>>, vector<16x1xf32>
    %148 = vector.broadcast %147 : vector<16x1xf32> to vector<16x256xf32>
    %149 = arith.addf %146, %148 : vector<16x256xf32>
    %cst_51 = arith.constant 5.000000e-01 : f32
    %150 = vector.broadcast %cst_51 : f32 to vector<16x256xf32>
    %151 = arith.mulf %150, %149 : vector<16x256xf32>
    %cst_52 = arith.constant 0.707106769 : f32
    %152 = vector.broadcast %cst_52 : f32 to vector<16x256xf32>
    %153 = arith.mulf %149, %152 : vector<16x256xf32>
    %154 = math.erf %153 : vector<16x256xf32>
    %cst_53 = arith.constant 1.000000e+00 : f32
    %155 = vector.broadcast %cst_53 : f32 to vector<16x256xf32>
    %156 = arith.addf %155, %154 : vector<16x256xf32>
    %157 = arith.mulf %151, %156 : vector<16x256xf32>
    %c0_54 = arith.constant 0 : index
    %c0_55 = arith.constant 0 : index
    %c0_56 = arith.constant 0 : index
    %158 = vector.load %arg4[%c0_54, %c0_55, %c0_56] : memref<1x16x256xf32, #tpu.memory_space<vmem>>, vector<1x16x256xf32>
    %159 = vector.shape_cast %158 : vector<1x16x256xf32> to vector<16x256xf32>
    %160 = vector.shape_cast %157 : vector<16x256xf32> to vector<1x16x256xf32>
    tpu.vector_store %arg4[%c0_54, %c0_55, %c0_56], %160 {strides = array<i32>} : memref<1x16x256xf32, #tpu.memory_space<vmem>>, vector<1x16x256xf32>,
    return
  }
  func.func @transform_0(%arg0: i32) -> (i32, i32, i32) {
    %c0_i32 = arith.constant 0 : i32
    %c0_i32_0 = arith.constant 0 : i32
    %c0_i32_1 = arith.constant 0 : i32
    return %arg0, %c0_i32, %c0_i32_0 : i32, i32, i32
  }
  func.func @transform_1(%arg0: i32) -> (i32, i32) {
    %c0_i32 = arith.constant 0 : i32
    %c0_i32_0 = arith.constant 0 : i32
    %c0_i32_1 = arith.constant 0 : i32
    return %c0_i32, %c0_i32_0 : i32, i32
  }
  func.func @transform_2(%arg0: i32) -> (i32, i32) {
    %c0_i32 = arith.constant 0 : i32
    %c0_i32_0 = arith.constant 0 : i32
    %c0_i32_1 = arith.constant 0 : i32
    return %c0_i32, %c0_i32_0 : i32, i32
  }
  func.func @transform_3(%arg0: i32) -> (i32, i32, i32) {
    %c0_i32 = arith.constant 0 : i32
    %c0_i32_0 = arith.constant 0 : i32
    %c0_i32_1 = arith.constant 0 : i32
    return %arg0, %c0_i32, %c0_i32_0 : i32, i32, i32
  }
}

</mosaic_0001>

<llo_original>
// kernel: tpu_custom_call.1
$region0: #{tpu_custom_call.1}
  #allocation0 [shape = 'u32[]', space=smem, size = 0x4, offset = 0x4, fixed_abs, tag = 'smem constant byte address 0x4 - core index']
  #allocation1 [shape = 'u32[72,128]{1,0:T(1,128)}', space=vmem, size = 0x9000, scoped, tag = 'internal scratch']
  %s0 = inlined_call_operand.hbm [shape: f32[2,16,256], index: 0, kind: input, shape index: {}]
  %s1 = inlined_call_operand.vmem [shape: f32[16,16], index: 1, kind: input, shape index: {}]
  %s2 = inlined_call_operand.vmem [shape: f32[16,1], index: 2, kind: input, shape index: {}]
  %s3 = inlined_call_operand.hbm [shape: f32[2,16,256], index: 3, kind: output, shape index: {}]
  %s4 = sld [smem:[#allocation0]]
  $region49: #{tpu_custom_call.1} parent=0
    _
  %s6 = ssub.s32 1, %s4
  %s7 = scalar_select 0, %s6, %s4
  $region1: #{tpu_custom_call.1} parent=0
    #allocation2 [shape = 'u8[32768]{0}', space=vmem, size = 0x8000, scoped, tag = 'input window, operand 0']
    #allocation3 [shape = 's32[2]{0}', space=sflag, size = 0x8, scoped, tag = 'scoped memory for tpu_custom_call.1']
    #allocation4 [shape = 's32[2]{0}', space=sflag, size = 0x8, scoped, tag = 'scoped memory for tpu_custom_call.1']
    #allocation5 [shape = 'u8[32768]{0}', space=vmem, size = 0x8000, scoped, tag = 'output window, operand 0']
    %8 = vsyncpa [#allocation3], 0
    %s9 = scalar_lea.sflag [#allocation3], 1
    %10 = vsyncpa %s9, 0
    %11 = vsyncpa [#allocation4], 0
    %s12 = scalar_lea.sflag [#allocation4], 1
    %13 = vsyncpa %s12, 0
    loop: start=0, step=1, limit=4
    $region2: #{tpu_custom_call.1} parent=1 // loop_pre_header
      _
    $region3: #{tpu_custom_call.1} parent=1 // loop_header
      %s15 = sphi 0, %s19
      %p16 = scmp.ge.s32.totalorder %s15, 4
      %s25 = sphi 0, %s27
      %s28 = sphi 0, %s25
      %s29 = sphi 0, %s28
      %s45 = sphi 0, %s29
      %s49 = sphi 0, %s49
      %s51 = sphi 0, %s49
      %s52 = sphi 0, %s51
      %s66 = sphi 0, %s52
      %s70 = sphi 0, %s70
      %s72 = sphi 0, %s70
      %s73 = sphi 0, %s72
      %s87 = sphi 0, %s73
      %s93 = sphi 0, %s95
      %s96 = sphi 0, %s93
      %s97 = sphi 0, %s96
      %s113 = sphi 0, %s97
    $region4: #{tpu_custom_call.1} parent=1 // loop_header_branch
      %18 = sbr.rel (%p16) target = $region8
    $region5: #{tpu_custom_call.1} parent=1 // loop_body
      %s20 = ssub.s32 %s15, 1
      %s21 = ssub.s32 %s15, 2
      %s22 = sadd.s32 %s15, 1
      %s23 = ssub.s32 %s15, %s22
      %p24 = scmp.eq.s32.totalorder %s23, 0
      %s26 = sadd.s32 %s25, 1
      %s27 = scalar_select %p24, %s25, %s26
      %p30 = pneg %p24
      %p31 = scmp.eq.s32.totalorder %s15, 1
      %p32 = por %p30, %p31
      %p33 = scmp.ne.s32.totalorder %s25, %s28
      %p34 = scmp.eq.s32.totalorder %s15, 0
      %p35 = por %p33, %p34
      %p36 = scmp.ne.s32.totalorder %s25, %s28
      %p37 = scmp.eq.s32.totalorder %s20, 1
      %p38 = por %p36, %p37
      %p39 = scmp.ne.s32.totalorder %s28, %s29
      %p40 = scmp.eq.s32.totalorder %s20, 0
      %p41 = por %p39, %p40
      %p42 = scmp.ne.s32.totalorder %s28, %s29
      %p43 = scmp.eq.s32.totalorder %s21, 1
      %p44 = por %p42, %p43
      %p46 = scmp.ne.s32.totalorder %s29, %s45
      %p47 = scmp.eq.s32.totalorder %s21, 0
      %p48 = por %p46, %p47
      %s50 = sadd.s32 %s49, 1
      %p53 = scmp.eq.s32.totalorder %s15, 1
      %p54 = scmp.ne.s32.totalorder %s49, %s51
      %p55 = scmp.eq.s32.totalorder %s15, 0
      %p56 = por %p54, %p55
      %p57 = scmp.ne.s32.totalorder %s49, %s51
      %p58 = scmp.eq.s32.totalorder %s20, 1
      %p59 = por %p57, %p58
      %p60 = scmp.ne.s32.totalorder %s51, %s52
      %p61 = scmp.eq.s32.totalorder %s20, 0
      %p62 = por %p60, %p61
      %p63 = scmp.ne.s32.totalorder %s51, %s52
      %p64 = scmp.eq.s32.totalorder %s21, 1
      %p65 = por %p63, %p64
      %p67 = scmp.ne.s32.totalorder %s52, %s66
      %p68 = scmp.eq.s32.totalorder %s21, 0
      %p69 = por %p67, %p68
      %s71 = sadd.s32 %s70, 1
      %p74 = scmp.eq.s32.totalorder %s15, 1
      %p75 = scmp.ne.s32.totalorder %s70, %s72
      %p76 = scmp.eq.s32.totalorder %s15, 0
      %p77 = por %p75, %p76
      %p78 = scmp.ne.s32.totalorder %s70, %s72
      %p79 = scmp.eq.s32.totalorder %s20, 1
      %p80 = por %p78, %p79
      %p81 = scmp.ne.s32.totalorder %s72, %s73
      %p82 = scmp.eq.s32.totalorder %s20, 0
      %p83 = por %p81, %p82
      %p84 = scmp.ne.s32.totalorder %s72, %s73
      %p85 = scmp.eq.s32.totalorder %s21, 1
      %p86 = por %p84, %p85
      %p88 = scmp.ne.s32.totalorder %s73, %s87
      %p89 = scmp.eq.s32.totalorder %s21, 0
      %p90 = por %p88, %p89
      %s91 = ssub.s32 %s15, %s22
      %p92 = scmp.eq.s32.totalorder %s91, 0
      %s94 = sadd.s32 %s93, 1
      %s95 = scalar_select %p92, %s93, %s94
      %p98 = pneg %p92
      %p99 = scmp.eq.s32.totalorder %s15, 1
      %p100 = por %p98, %p99
      %p101 = scmp.ne.s32.totalorder %s93, %s96
      %p102 = scmp.eq.s32.totalorder %s15, 0
      %p103 = por %p101, %p102
      %p104 = scmp.ne.s32.totalorder %s93, %s96
      %p105 = scmp.eq.s32.totalorder %s20, 1
      %p106 = por %p104, %p105
      %p107 = scmp.ne.s32.totalorder %s96, %s97
      %p108 = scmp.eq.s32.totalorder %s20, 0
      %p109 = por %p107, %p108
      %p110 = scmp.ne.s32.totalorder %s96, %s97
      %p111 = scmp.eq.s32.totalorder %s21, 1
      %p112 = por %p110, %p111
      %p114 = scmp.ne.s32.totalorder %s97, %s113
      %p115 = scmp.eq.s32.totalorder %s21, 0
      %p116 = por %p114, %p115
      %p117 = scmp.le.s32.totalorder 1, %s15
      %p118 = scmp.lt.s32.totalorder %s15, 3
      %p119 = pnand %p117, %p118
      %p120 = pneg %p119
      // Predicated region
      $region9: #{tpu_custom_call.1} parent=5 // pred_check
        _
      $region10: #{tpu_custom_call.1} parent=5 // pred_check_branch
        %122 = sbr.rel (%p119) target = $region12
      $region11: #{tpu_custom_call.1} parent=5 // pred_region
        %s123 = ssub.s32 %s15, 1
        // Predicated region
        $region13: #{tpu_custom_call.1} parent=11 // pred_check
          %p124 = pneg %p62
        $region14: #{tpu_custom_call.1} parent=11 // pred_check_branch
          %126 = sbr.rel (%p124) target = $region16
        $region15: #{tpu_custom_call.1} parent=11 // pred_region
          _
        $region16: #{tpu_custom_call.1} parent=11 // pred_fallthru
          _
        // Predicated region
        $region17: #{tpu_custom_call.1} parent=11 // pred_check
          %p127 = pneg %p83
        $region18: #{tpu_custom_call.1} parent=11 // pred_check_branch
          %129 = sbr.rel (%p127) target = $region20
        $region19: #{tpu_custom_call.1} parent=11 // pred_region
          _
        $region20: #{tpu_custom_call.1} parent=11 // pred_fallthru
          _
      $region12: #{tpu_custom_call.1} parent=5 // pred_fallthru
        _
      %p130 = scmp.lt.s32.totalorder %s15, 2
      // Predicated region
      $region21: #{tpu_custom_call.1} parent=5 // pred_check
        %p131 = pneg %p130
      $region22: #{tpu_custom_call.1} parent=5 // pred_check_branch
        %133 = sbr.rel (%p131) target = $region24
      $region23: #{tpu_custom_call.1} parent=5 // pred_region
        // Predicated region
        $region25: #{tpu_custom_call.1} parent=23 // pred_check
          %p134 = pneg %p35
        $region26: #{tpu_custom_call.1} parent=23 // pred_check_branch
          %136 = sbr.rel (%p134) target = $region28
        $region27: #{tpu_custom_call.1} parent=23 // pred_region
          %s137 = sand.u32 %s25, 1
          %s138 = scalar_lea.sflag [#allocation3], %s137
          %s139 = sand.u32 %s25, 1
          %s140 = smul.addr %s139, 32
          %s141 = scalar_lea.vmem [#allocation2], %s140
          %143 = vsyncadd %s138, 0
          %s144 = smul.addr %s15, 4
          %s145 = smul.addr %s144, 8
          %s146 = scalar_lea.hbm %s0, %s145
          %s147 = sshll.u32 %s146, 4
          %s148 = int_to_ptr.hbm [resolvable:$true] %s147
          %s149 = sshll.u32 %s141, 4
          %s150 = int_to_ptr.vmem [resolvable:$true] %s149
          %155 = dma.hbm_to_vmem [thread:$0]  %s148, 512, %s150, %s138, 256, 256, 16
        $region28: #{tpu_custom_call.1} parent=23 // pred_fallthru
          _
      $region24: #{tpu_custom_call.1} parent=5 // pred_fallthru
        _
      %p156 = scmp.le.s32.totalorder 1, %s15
      %p157 = scmp.lt.s32.totalorder %s15, 3
      %p158 = pnand %p156, %p157
      %p159 = pneg %p158
      // Predicated region
      $region29: #{tpu_custom_call.1} parent=5 // pred_check
        _
      $region30: #{tpu_custom_call.1} parent=5 // pred_check_branch
        %161 = sbr.rel (%p158) target = $region32
      $region31: #{tpu_custom_call.1} parent=5 // pred_region
        %s162 = ssub.s32 %s15, 1
        %s163 = sand.u32 %s28, 1
        %s164 = scalar_lea.sflag [#allocation3], %s163
        %s165 = sand.u32 %s28, 1
        %s166 = smul.addr %s165, 32
        %s167 = scalar_lea.vmem [#allocation2], %s166
        // Predicated region
        $region33: #{tpu_custom_call.1} parent=31 // pred_check
          %p168 = pneg %p41
        $region34: #{tpu_custom_call.1} parent=31 // pred_check_branch
          %170 = sbr.rel (%p168) target = $region36
        $region35: #{tpu_custom_call.1} parent=31 // pred_region
          %172 = dma.done %s164, 512
        $region36: #{tpu_custom_call.1} parent=31 // pred_fallthru
          _
        %s173 = sand.u32 %s28, 1
        %s174 = scalar_lea.sflag [#allocation3], %s173
        %s175 = sand.u32 %s28, 1
        %s176 = smul.addr %s175, 32
        %s177 = scalar_lea.vmem [#allocation2], %s176
        %p178 = pneg %p41
        %p179 = pneg %p38
        %p180 = pneg %p62
        %p181 = pneg %p59
        %p182 = pneg %p83
        %p183 = pneg %p80
        %p184 = pneg %p109
        %p185 = pneg %p106
        %s186 = sand.u32 %s96, 1
        %s187 = scalar_lea.sflag [#allocation4], %s186
        %s188 = sand.u32 %s96, 1
        %s189 = smul.addr %s188, 32
        %s190 = scalar_lea.vmem [#allocation5], %s189
        %v191 = vld [vmem:[%s167] sm:$0xff]
        %v192 = vld [vmem:[%s167 + $0x8] sm:$0xff]
        %v193 = vld [vmem:[%s167 + $0x10] sm:$0xff]
        %v194 = vld [vmem:[%s167 + $0x18] sm:$0xff]
        %195 = vrot.lane.b32.xlu0 %v191, 16
        %v196 = vpop.permute.xlu0 %195
        %197 = vrot.lane.b32.xlu0 %v192, 16
        %v198 = vpop.permute.xlu0 %197
        %v199 = vlaneseq
        %v200 = vand.u32 %v199, 127
        %vm201 = vcmp.lt.s32.totalorder %v200, 16
        %v202 = vsel %vm201, %v196, %v198
        %v203 = vsel %vm201, %v198, %v196
        %v206 = vrot.slane %v191, 2
        %v207 = vrot.slane %v192, 2
        %210 = vrot.lane.b32.xlu0 %v206, 112
        %v211 = vpop.permute.xlu0 %210
        %212 = vrot.lane.b32.xlu0 %v207, 112
        %v213 = vpop.permute.xlu0 %212
        %vm214 = vcmp.lt.s32.totalorder %v200, 112
        %v215 = vsel %vm214, %v211, %v213
        %v216 = vsel %vm214, %v213, %v211
        %v217 = vrot.slane %v191, 4
        %v218 = vrot.slane %v192, 4
        %221 = vrot.lane.b32.xlu0 %v217, 1
        %v222 = vpop.permute.xlu0 %221
        %223 = vrot.lane.b32.xlu0 %v218, 1
        %v224 = vpop.permute.xlu0 %223
        %vm225 = vcmp.lt.s32.totalorder %v200, 1
        %v226 = vsel %vm225, %v222, %v224
        %v227 = vsel %vm225, %v224, %v222
        %228 = vrot.lane.b32.xlu0 %v217, 113
        %v229 = vpop.permute.xlu0 %228
        %230 = vrot.lane.b32.xlu0 %v218, 113
        %v231 = vpop.permute.xlu0 %230
        %vm232 = vcmp.lt.s32.totalorder %v200, 113
        %v233 = vsel %vm232, %v229, %v231
        %v234 = vsel %vm232, %v231, %v229
        %v235 = vadd.s32 %v200, 128
        %vm236 = vcmp.lt.s32.totalorder %v200, 0
        %v237 = vsub.s32 0, %v200
        %v238 = vsel %vm236, %v237, %v200
        %v239 = vshrl.u32 %v238, 4
        %v240 = vand.u32 %v238, 15
        %v241 = vsub.s32 0, %v240
        %v242 = vsel %vm236, %v241, %v240
        %vm243 = vcmp.lt.s32.totalorder %v235, 0
        %v244 = vsub.s32 0, %v235
        %v245 = vsel %vm243, %v244, %v235
        %v246 = vshrl.u32 %v245, 4
        %v247 = vand.u32 %v245, 15
        %v248 = vsub.s32 0, %v247
        %v249 = vsel %vm243, %v248, %v247
        %vm250 = vcmp.ne.s32.totalorder %v242, 0
        %vm251 = vcmp.ne.s32.totalorder %v249, 0
        %vm252 = vcmp.lt.s32.totalorder %v242, 0
        %vm253 = vcmp.lt.s32.totalorder %v249, 0
        %vm254 = vmand %vm252, %vm250
        %vm255 = vmand %vm253, %vm251
        %v256 = vadd.s32 %v242, 16
        %v257 = vadd.s32 %v249, 16
        %v258 = vsel %vm254, %v256, %v242
        %v259 = vsel %vm255, %v257, %v249
        %vm260 = vcmp.lt.s32.totalorder %v258, 1
        %vm261 = vcmp.lt.s32.totalorder %v259, 1
        %v262 = vsel %vm260, %v233, %v227
        %v263 = vsel %vm261, %v234, %v226
        %v264 = vrot.slane %v191, 6
        %v265 = vrot.slane %v192, 6
        %268 = vrot.lane.b32.xlu0 %v264, 127
        %v269 = vpop.permute.xlu0 %268
        %270 = vrot.lane.b32.xlu0 %v265, 127
        %v271 = vpop.permute.xlu0 %270
        %vm272 = vcmp.lt.s32.totalorder %v200, 127
        %v273 = vsel %vm272, %v269, %v271
        %v274 = vsel %vm272, %v271, %v269
        %275 = vrot.lane.b32.xlu0 %v264, 15
        %v276 = vpop.permute.xlu0 %275
        %277 = vrot.lane.b32.xlu0 %v265, 15
        %v278 = vpop.permute.xlu0 %277
        %vm279 = vcmp.lt.s32.totalorder %v200, 15
        %v280 = vsel %vm279, %v276, %v278
        %v281 = vsel %vm279, %v278, %v276
        %vm282 = vcmp.ge.s32.totalorder %v258, 15
        %vm283 = vcmp.ge.s32.totalorder %v259, 15
        %v284 = vsel %vm282, %v281, %v273
        %v285 = vsel %vm283, %v280, %v274
        %286 = vrot.lane.b32.xlu0 %v193, 17
        %v287 = vpop.permute.xlu0 %286
        %288 = vrot.lane.b32.xlu0 %v194, 17
        %v289 = vpop.permute.xlu0 %288
        %vm290 = vcmp.lt.s32.totalorder %v200, 17
        %v291 = vsel %vm290, %v287, %v289
        %v292 = vsel %vm290, %v289, %v287
        %293 = vrot.lane.b32.xlu0 %v193, 1
        %v294 = vpop.permute.xlu0 %293
        %295 = vrot.lane.b32.xlu0 %v194, 1
        %v296 = vpop.permute.xlu0 %295
        %v297 = vsel %vm225, %v294, %v296
        %v298 = vsel %vm225, %v296, %v294
        %v299 = vsel %vm260, %v298, %v292
        %v300 = vsel %vm261, %v297, %v291
        %v303 = vrot.slane %v193, 2
        %v304 = vrot.slane %v194, 2
        %307 = vrot.lane.b32.xlu0 %v303, 111
        %v308 = vpop.permute.xlu0 %307
        %309 = vrot.lane.b32.xlu0 %v304, 111
        %v310 = vpop.permute.xlu0 %309
        %vm311 = vcmp.lt.s32.totalorder %v200, 111
        %v312 = vsel %vm311, %v308, %v310
        %v313 = vsel %vm311, %v310, %v308
        %314 = vrot.lane.b32.xlu0 %v303, 127
        %v315 = vpop.permute.xlu0 %314
        %316 = vrot.lane.b32.xlu0 %v304, 127
        %v317 = vpop.permute.xlu0 %316
        %v318 = vsel %vm272, %v315, %v317
        %v319 = vsel %vm272, %v317, %v315
        %v320 = vsel %vm282, %v318, %v312
        %v321 = vsel %vm283, %v319, %v313
        %v322 = vrot.slane %v193, 4
        %v323 = vrot.slane %v194, 4
        %326 = vrot.lane.b32.xlu0 %v322, 15
        %v327 = vpop.permute.xlu0 %326
        %328 = vrot.lane.b32.xlu0 %v323, 15
        %v329 = vpop.permute.xlu0 %328
        %v330 = vsel %vm279, %v327, %v329
        %v331 = vsel %vm279, %v329, %v327
        %332 = vrot.lane.b32.xlu0 %v322, 31
        %v333 = vpop.permute.xlu0 %332
        %334 = vrot.lane.b32.xlu0 %v323, 31
        %v335 = vpop.permute.xlu0 %334
        %vm336 = vcmp.lt.s32.totalorder %v200, 31
        %v337 = vsel %vm336, %v333, %v335
        %v338 = vsel %vm336, %v335, %v333
        %v339 = vsel %vm282, %v338, %v331
        %v340 = vsel %vm283, %v337, %v330
        %v341 = vrot.slane %v193, 6
        %v342 = vrot.slane %v194, 6
        %345 = vrot.lane.b32.xlu0 %v341, 113
        %v346 = vpop.permute.xlu0 %345
        %347 = vrot.lane.b32.xlu0 %v342, 113
        %v348 = vpop.permute.xlu0 %347
        %v349 = vsel %vm232, %v346, %v348
        %v350 = vsel %vm232, %v348, %v346
        %351 = vrot.lane.b32.xlu0 %v341, 97
        %v352 = vpop.permute.xlu0 %351
        %353 = vrot.lane.b32.xlu0 %v342, 97
        %v354 = vpop.permute.xlu0 %353
        %vm355 = vcmp.lt.s32.totalorder %v200, 97
        %v356 = vsel %vm355, %v352, %v354
        %v357 = vsel %vm355, %v354, %v352
        %v358 = vsel %vm260, %v356, %v349
        %v359 = vsel %vm261, %v357, %v350
        %v362 = vrot.slane %v215, 6
        %v363 = vrot.slane %v216, 6
        %v368 = vrot.slane %v262, 4
        %v369 = vrot.slane %v263, 4
        %v374 = vrot.slane %v284, 2
        %v375 = vrot.slane %v285, 2
        %v380 = vrot.slane %v320, 6
        %v381 = vrot.slane %v321, 6
        %v386 = vrot.slane %v339, 4
        %v387 = vrot.slane %v340, 4
        %v392 = vrot.slane %v358, 2
        %v393 = vrot.slane %v359, 2
        %vm396 = vcmask 1041408
        %v397 = vsel %vm396, %v203, %v362
        %v398 = vsel %vm396, %v202, %v363
        %vm399 = vcmask 1043456
        %v400 = vsel %vm399, %v397, %v368
        %v401 = vsel %vm399, %v398, %v369
        %vm402 = vcmask 1045504
        %v403 = vsel %vm402, %v400, %v374
        %v404 = vsel %vm402, %v401, %v375
        %v405 = vsel %vm396, %v299, %v380
        %v406 = vsel %vm396, %v300, %v381
        %v407 = vsel %vm399, %v405, %v386
        %v408 = vsel %vm399, %v406, %v387
        %v409 = vsel %vm402, %v407, %v392
        %v410 = vsel %vm402, %v408, %v393
        %v411 = vld [vmem:[%s1] sm:$0xff]
        %v412 = vld [vmem:[%s1 + $0x8] sm:$0xff]
        %v413 = vld [vmem:[%s2] sm:$0xff]
        %v414 = vld [vmem:[%s2 + $0x8] sm:$0xff]
        %416 = vset.pattern.permute.xlu0 0
        %417 = vperm.xlu0 %416, %v413
        %v418 = vpop.permute.xlu0 %417
        %421 = vset.pattern.permute.xlu0 0
        %422 = vperm.xlu0 %421, %v414
        %v423 = vpop.permute.xlu0 %422
        %vm425 = vcmask 130048
        %v427 = vsel %vm425, %v411, 0
        %v430 = vsel %vm425, %v412, 0
        %432 = vmatpush.msra.mxu0 0.0
        %433 = vmatpush.msra.mxu0 0.0
        %434 = vmatpush.msra.mxu0 0.0
        %435 = vmatpush.msra.mxu0 0.0
        %436 = vmatpush.msra.mxu0 0.0
        %437 = vmatpush.msra.mxu0 0.0
        %438 = vmatpush.msra.mxu0 0.0
        %439 = vmatpush.msra.mxu0 0.0
        %440 = vmatpush.msra.mxu0 0.0
        %441 = vmatpush.msra.mxu0 0.0
        %442 = vmatpush.msra.mxu0 0.0
        %443 = vmatpush.msra.mxu0 0.0
        %444 = vmatpush.msra.mxu0 0.0
        %445 = vmatpush.msra.mxu0 0.0
        %446 = vmatpush.msra.mxu0 %v409
        %447 = vmatpush.msra.mxu0 %v403
        %448 = vmatmul.f32.gmra.mxu0 %v427
        %v449 = vpop.f32.mrf.mxu0
        %v450 = vadd.f32 %v418, %v449
        %451 = vmatmul.f32.gmra.mxu0 %v430
        %v452 = vpop.f32.mrf.mxu0
        %v453 = vadd.f32 %v423, %v452
        %454 = vdwg.mxu0
        %455 = vmatpush.msra.mxu0 0.0
        %456 = vmatpush.msra.mxu0 0.0
        %457 = vmatpush.msra.mxu0 0.0
        %458 = vmatpush.msra.mxu0 0.0
        %459 = vmatpush.msra.mxu0 0.0
        %460 = vmatpush.msra.mxu0 0.0
        %461 = vmatpush.msra.mxu0 0.0
        %462 = vmatpush.msra.mxu0 0.0
        %463 = vmatpush.msra.mxu0 0.0
        %464 = vmatpush.msra.mxu0 0.0
        %465 = vmatpush.msra.mxu0 0.0
        %466 = vmatpush.msra.mxu0 0.0
        %467 = vmatpush.msra.mxu0 0.0
        %468 = vmatpush.msra.mxu0 0.0
        %469 = vmatpush.msra.mxu0 %v410
        %470 = vmatpush.msra.mxu0 %v404
        %471 = vmatmul.f32.gmra.mxu0 %v427
        %v472 = vpop.f32.mrf.mxu0
        %v473 = vadd.f32 %v418, %v472
        %474 = vmatmul.f32.gmra.mxu0 %v430
        %v475 = vpop.f32.mrf.mxu0
        %v476 = vadd.f32 %v423, %v475
        %477 = vdwg.mxu0
        %v478 = vmul.f32 %v450, 0.5
        %v479 = vmul.f32 %v473, 0.5
        %v480 = vmul.f32 %v453, 0.5
        %v481 = vmul.f32 %v476, 0.5
        %v482 = vmul.f32 %v450, 0.70710677
        %v483 = vmul.f32 %v473, 0.70710677
        %v484 = vmul.f32 %v453, 0.70710677
        %v485 = vmul.f32 %v476, 0.70710677
        %v486 = vmul.f32 %v482, %v482
        %v487 = vmin.f32 16.0, %v486
        %v488 = vmul.f32 %v487, 2.1237322e-06
        %v489 = vadd.f32 %v488, 0.00028619796
        %v490 = vmul.f32 %v487, %v489
        %v491 = vadd.f32 %v490, 0.0036580483
        %v492 = vmul.f32 %v487, %v491
        %v493 = vadd.f32 %v492, 0.05243302
        %v494 = vmul.f32 %v487, %v493
        %v495 = vadd.f32 %v494, 0.18741608
        %v496 = vmul.f32 %v487, %v495
        %v497 = vadd.f32 %v496, 1.1283791
        %v498 = vmul.f32 %v482, %v497
        %v499 = vmul.f32 %v487, 3.8918573e-05
        %v500 = vadd.f32 %v499, 0.001143296
        %v501 = vmul.f32 %v487, %v500
        %v502 = vadd.f32 %v501, 0.014752088
        %v503 = vmul.f32 %v487, %v502
        %v504 = vadd.f32 %v503, 0.112945676
        %v505 = vmul.f32 %v487, %v504
        %v506 = vadd.f32 %v505, 0.4994258
        %v507 = vmul.f32 %v487, %v506
        %v508 = vadd.f32 %v507, 1.0
        %v509 = vrcp.pop %v508
        %v510 = vmul.f32 %v508, %v509
        %v511 = vsub.f32 1.0, %v510
        %v512 = vmul.f32 %v509, %v511
        %v513 = vadd.f32 %v509, %v512
        %vm514 = vweird.f32 %v508
        %vm515 = vweird.f32 %v509
        %vm516 = vmor %vm514, %vm515
        %v517 = vsel %vm516, %v509, %v513
        %v518 = vand.u32 2147483647, %v508
        %vm519 = vcmp.eq.f32.partialorder %v518, 8.507059e+37
        %v520 = vand.u32 %v508, 2147483648
        %v521 = vor.u32 1.1754944e-38, %v520
        %v522 = vsel %vm519, %v521, %v517
        %v523 = vmul.f32 %v498, %v522
        %v524 = vmin.f32 %v523, 1.0
        %v525 = vmax.f32 %v524, -1.0
        %v526 = vmul.f32 %v483, %v483
        %v527 = vmin.f32 16.0, %v526
        %v528 = vmul.f32 %v527, 2.1237322e-06
        %v529 = vadd.f32 %v528, 0.00028619796
        %v530 = vmul.f32 %v527, %v529
        %v531 = vadd.f32 %v530, 0.0036580483
        %v532 = vmul.f32 %v527, %v531
        %v533 = vadd.f32 %v532, 0.05243302
        %v534 = vmul.f32 %v527, %v533
        %v535 = vadd.f32 %v534, 0.18741608
        %v536 = vmul.f32 %v527, %v535
        %v537 = vadd.f32 %v536, 1.1283791
        %v538 = vmul.f32 %v483, %v537
        %v539 = vmul.f32 %v527, 3.8918573e-05
        %v540 = vadd.f32 %v539, 0.001143296
        %v541 = vmul.f32 %v527, %v540
        %v542 = vadd.f32 %v541, 0.014752088
        %v543 = vmul.f32 %v527, %v542
        %v544 = vadd.f32 %v543, 0.112945676
        %v545 = vmul.f32 %v527, %v544
        %v546 = vadd.f32 %v545, 0.4994258
        %v547 = vmul.f32 %v527, %v546
        %v548 = vadd.f32 %v547, 1.0
        %v549 = vrcp.pop %v548
        %v550 = vmul.f32 %v548, %v549
        %v551 = vsub.f32 1.0, %v550
        %v552 = vmul.f32 %v549, %v551
        %v553 = vadd.f32 %v549, %v552
        %vm554 = vweird.f32 %v548
        %vm555 = vweird.f32 %v549
        %vm556 = vmor %vm554, %vm555
        %v557 = vsel %vm556, %v549, %v553
        %v558 = vand.u32 2147483647, %v548
        %vm559 = vcmp.eq.f32.partialorder %v558, 8.507059e+37
        %v560 = vand.u32 %v548, 2147483648
        %v561 = vor.u32 1.1754944e-38, %v560
        %v562 = vsel %vm559, %v561, %v557
        %v563 = vmul.f32 %v538, %v562
        %v564 = vmin.f32 %v563, 1.0
        %v565 = vmax.f32 %v564, -1.0
        %v566 = vmul.f32 %v484, %v484
        %v567 = vmin.f32 16.0, %v566
        %v568 = vmul.f32 %v567, 2.1237322e-06
        %v569 = vadd.f32 %v568, 0.00028619796
        %v570 = vmul.f32 %v567, %v569
        %v571 = vadd.f32 %v570, 0.0036580483
        %v572 = vmul.f32 %v567, %v571
        %v573 = vadd.f32 %v572, 0.05243302
        %v574 = vmul.f32 %v567, %v573
        %v575 = vadd.f32 %v574, 0.18741608
        %v576 = vmul.f32 %v567, %v575
        %v577 = vadd.f32 %v576, 1.1283791
        %v578 = vmul.f32 %v484, %v577
        %v579 = vmul.f32 %v567, 3.8918573e-05
        %v580 = vadd.f32 %v579, 0.001143296
        %v581 = vmul.f32 %v567, %v580
        %v582 = vadd.f32 %v581, 0.014752088
        %v583 = vmul.f32 %v567, %v582
        %v584 = vadd.f32 %v583, 0.112945676
        %v585 = vmul.f32 %v567, %v584
        %v586 = vadd.f32 %v585, 0.4994258
        %v587 = vmul.f32 %v567, %v586
        %v588 = vadd.f32 %v587, 1.0
        %v589 = vrcp.pop %v588
        %v590 = vmul.f32 %v588, %v589
        %v591 = vsub.f32 1.0, %v590
        %v592 = vmul.f32 %v589, %v591
        %v593 = vadd.f32 %v589, %v592
        %vm594 = vweird.f32 %v588
        %vm595 = vweird.f32 %v589
        %vm596 = vmor %vm594, %vm595
        %v597 = vsel %vm596, %v589, %v593
        %v598 = vand.u32 2147483647, %v588
        %vm599 = vcmp.eq.f32.partialorder %v598, 8.507059e+37
        %v600 = vand.u32 %v588, 2147483648
        %v601 = vor.u32 1.1754944e-38, %v600
        %v602 = vsel %vm599, %v601, %v597
        %v603 = vmul.f32 %v578, %v602
        %v604 = vmin.f32 %v603, 1.0
        %v605 = vmax.f32 %v604, -1.0
        %v606 = vmul.f32 %v485, %v485
        %v607 = vmin.f32 16.0, %v606
        %v608 = vmul.f32 %v607, 2.1237322e-06
        %v609 = vadd.f32 %v608, 0.00028619796
        %v610 = vmul.f32 %v607, %v609
        %v611 = vadd.f32 %v610, 0.0036580483
        %v612 = vmul.f32 %v607, %v611
        %v613 = vadd.f32 %v612, 0.05243302
        %v614 = vmul.f32 %v607, %v613
        %v615 = vadd.f32 %v614, 0.18741608
        %v616 = vmul.f32 %v607, %v615
        %v617 = vadd.f32 %v616, 1.1283791
        %v618 = vmul.f32 %v485, %v617
        %v619 = vmul.f32 %v607, 3.8918573e-05
        %v620 = vadd.f32 %v619, 0.001143296
        %v621 = vmul.f32 %v607, %v620
        %v622 = vadd.f32 %v621, 0.014752088
        %v623 = vmul.f32 %v607, %v622
        %v624 = vadd.f32 %v623, 0.112945676
        %v625 = vmul.f32 %v607, %v624
        %v626 = vadd.f32 %v625, 0.4994258
        %v627 = vmul.f32 %v607, %v626
        %v628 = vadd.f32 %v627, 1.0
        %v629 = vrcp.pop %v628
        %v630 = vmul.f32 %v628, %v629
        %v631 = vsub.f32 1.0, %v630
        %v632 = vmul.f32 %v629, %v631
        %v633 = vadd.f32 %v629, %v632
        %vm634 = vweird.f32 %v628
        %vm635 = vweird.f32 %v629
        %vm636 = vmor %vm634, %vm635
        %v637 = vsel %vm636, %v629, %v633
        %v638 = vand.u32 2147483647, %v628
        %vm639 = vcmp.eq.f32.partialorder %v638, 8.507059e+37
        %v640 = vand.u32 %v628, 2147483648
        %v641 = vor.u32 1.1754944e-38, %v640
        %v642 = vsel %vm639, %v641, %v637
        %v643 = vmul.f32 %v618, %v642
        %v644 = vmin.f32 %v643, 1.0
        %v645 = vmax.f32 %v644, -1.0
        %v646 = vadd.f32 %v525, 1.0
        %v647 = vadd.f32 %v565, 1.0
        %v648 = vadd.f32 %v605, 1.0
        %v649 = vadd.f32 %v645, 1.0
        %v650 = vmul.f32 %v478, %v646
        %v651 = vmul.f32 %v479, %v647
        %v652 = vmul.f32 %v480, %v648
        %v653 = vmul.f32 %v481, %v649
        %654 = vst [vmem:[%s190] sm:$0xff] %v650
        %655 = vst [vmem:[%s190 + $0x8] sm:$0xff] %v651
        %656 = vst [vmem:[%s190 + $0x10] sm:$0xff] %v652
        %657 = vst [vmem:[%s190 + $0x18] sm:$0xff] %v653
        %s658 = sand.u32 %s96, 1
        %s659 = scalar_lea.sflag [#allocation4], %s658
        %s660 = sand.u32 %s96, 1
        %s661 = smul.addr %s660, 32
        %s662 = scalar_lea.vmem [#allocation5], %s661
        // Predicated region
        $region37: #{tpu_custom_call.1} parent=31 // pred_check
          %p663 = pneg %p106
        $region38: #{tpu_custom_call.1} parent=31 // pred_check_branch
          %665 = sbr.rel (%p663) target = $region40
        $region39: #{tpu_custom_call.1} parent=31 // pred_region
          %667 = vsyncadd %s659, 0
          %s668 = smul.addr %s20, 4
          %s669 = smul.addr %s668, 8
          %s670 = scalar_lea.hbm %s3, %s669
          %s671 = sshll.u32 %s662, 4
          %s672 = int_to_ptr.vmem [resolvable:$true] %s671
          %s673 = sshll.u32 %s670, 4
          %s674 = int_to_ptr.hbm [resolvable:$true] %s673
          %679 = dma.vmem_to_hbm [thread:$0]  %s672, 512, %s674, %s659, 256, 256, 16
        $region40: #{tpu_custom_call.1} parent=31 // pred_fallthru
          _
      $region32: #{tpu_custom_call.1} parent=5 // pred_fallthru
        _
      %p680 = scmp.le.s32.totalorder 2, %s15
      // Predicated region
      $region41: #{tpu_custom_call.1} parent=5 // pred_check
        %p681 = pneg %p680
      $region42: #{tpu_custom_call.1} parent=5 // pred_check_branch
        %683 = sbr.rel (%p681) target = $region44
      $region43: #{tpu_custom_call.1} parent=5 // pred_region
        %s684 = ssub.s32 %s15, 2
        // Predicated region
        $region45: #{tpu_custom_call.1} parent=43 // pred_check
          %p685 = pneg %p112
        $region46: #{tpu_custom_call.1} parent=43 // pred_check_branch
          %687 = sbr.rel (%p685) target = $region48
        $region47: #{tpu_custom_call.1} parent=43 // pred_region
          %s688 = sand.u32 %s97, 1
          %s689 = scalar_lea.sflag [#allocation4], %s688
          %s690 = sand.u32 %s97, 1
          %s691 = smul.addr %s690, 32
          %s692 = scalar_lea.vmem [#allocation5], %s691
          %694 = dma.done %s689, 512
        $region48: #{tpu_custom_call.1} parent=43 // pred_fallthru
          _
      $region44: #{tpu_custom_call.1} parent=5 // pred_fallthru
        _
    $region6: #{tpu_custom_call.1} parent=1 // loop_footer
      %s19 = sadd.s32 1, %s15
    $region7: #{tpu_custom_call.1} parent=1 // loop_footer_branch
      %14 = sbr.rel target = $region3
    $region8: #{tpu_custom_call.1} parent=1 // loop_exit
      _
    %695 = vsyncpa [#allocation3], 1
    %s696 = scalar_lea.sflag [#allocation3], 1
    %697 = vsyncpa %s696, 1
    %698 = vsyncpa [#allocation4], 1
    %s699 = scalar_lea.sflag [#allocation4], 1
    %700 = vsyncpa %s699, 1

</llo_original>
